<compile_context>
chip_gen: v5e
topology: v5e:2x2
jax: 0.10.0
libtpu: 0.0.40
codegen_flags: <defaults>
</compile_context>

<pallas_src>
import functools

import jax
import jax.numpy as jnp
from jax.experimental import pallas as pl
from jax.experimental.pallas import tpu as pltpu


def classify_ae_kernel(x_ref, we_ref, be_ref, wcd_ref, bcd_ref, o_ref):
    # encoder: z = tanh(x @ We + be)  -- bf16 operands, f32 accumulation, tanh in f32 (EUP)
    z = jnp.tanh(
        jnp.dot(x_ref[...], we_ref[...], preferred_element_type=jnp.float32)
        + be_ref[...]
    )
    # fused clf + decoder: one lane-dense MXU matmul, single bias row-add, one wide store
    o_ref[...] = (
        jnp.dot(z.astype(wcd_ref.dtype), wcd_ref[...],
                preferred_element_type=jnp.float32)
        + bcd_ref[...]
    ).astype(o_ref.dtype)


def _round_up(n, m):
    return ((n + m - 1) // m) * m


def _pick_tile_b(B, *, max_rows=512, align=16):
    """Largest batch tile <= max_rows that divides B, is bf16-sublane aligned, and
    (when possible) leaves >= 2 grid steps for pipelining / multi-TensorCore sharding."""
    candidates = [t for t in range(align, min(B, max_rows) + 1, align) if B % t == 0]
    if not candidates:
        return B  # block == full array dim is always legal
    multi = [t for t in candidates if B // t >= 2]
    return max(multi) if multi else max(candidates)


def classify_ae_forward(x, params, *, tile_b=None, compute_dtype=jnp.bfloat16):
    """ClassifyAE forward pass in one Pallas kernel.

    x: (B, in_features) float32
    params: dict with we(in,hid) be(1,hid) wc(hid,out) bc(1,out) wd(hid,in) bd(1,in)
            (weights stored transposed relative to torch nn.Linear, i.e. (fan_in, fan_out))
    returns: (y_hat (B, out), x_ (B, in))
    """
    B, in_f = x.shape
    hid_f = params["we"].shape[1]
    out_f = params["wc"].shape[1]

    # ---- lane-dense padding / fusion (weights are tiny; done once per call) ----
    hid_p = _round_up(hid_f, 128)            # z fills full 128-lane vregs / MXU columns
    ncd = out_f + in_f                       # fused clf|decoder output width
    ncd_p = _round_up(ncd, 128)              # padded so output stores are unmasked vst

    cdt = compute_dtype
    we = jnp.zeros((in_f, hid_p), cdt).at[:, :hid_f].set(params["we"].astype(cdt))
    be = jnp.zeros((1, hid_p), jnp.float32).at[:, :hid_f].set(
        params["be"].astype(jnp.float32))
    # padded hid cols: we=0, be=0 -> z_pad = tanh(0) = 0; padded wcd rows = 0 -> no effect.
    wcd = jnp.zeros((hid_p, ncd_p), cdt)
    wcd = wcd.at[:hid_f, :out_f].set(params["wc"].astype(cdt))
    wcd = wcd.at[:hid_f, out_f:ncd].set(params["wd"].astype(cdt))
    bcd = jnp.zeros((1, ncd_p), jnp.float32)
    bcd = bcd.at[:, :out_f].set(params["bc"].astype(jnp.float32))
    bcd = bcd.at[:, out_f:ncd].set(params["bd"].astype(jnp.float32))

    x_c = x.astype(cdt)

    # ---- batch tiling ----
    if tile_b is None:
        tile_b = _pick_tile_b(B)
    assert B % tile_b == 0, "tile_b must divide batch"
    grid = (B // tile_b,)

    # ---- VMEM budget: double-buffered x/out tiles + resident weights + z scratch ----
    cs = jnp.dtype(cdt).itemsize
    x_tile_bytes = tile_b * in_f * cs
    o_tile_bytes = tile_b * ncd_p * 4
    weights_bytes = (in_f * hid_p * cs + hid_p * 4
                     + hid_p * ncd_p * cs + ncd_p * 4)
    z_scratch_bytes = tile_b * hid_p * (4 + cs)
    vmem_est = 2 * (x_tile_bytes + o_tile_bytes) + 2 * weights_bytes \
        + z_scratch_bytes + (4 << 20)
    vmem_bytes = int(min(max(vmem_est, 16 << 20), 48 << 20))

    cost = pl.CostEstimate(
        flops=2 * B * (in_f * hid_p + hid_p * ncd_p),
        transcendentals=B * hid_p,
        bytes_accessed=B * in_f * cs + B * ncd_p * 4 + weights_bytes,
    )

    in_specs = [
        pl.BlockSpec((tile_b, in_f), lambda i: (i, 0)),   # x tile (streams over batch)
        pl.BlockSpec((in_f, hid_p), lambda i: (0, 0)),    # We (resident)
        pl.BlockSpec((1, hid_p), lambda i: (0, 0)),       # be
        pl.BlockSpec((hid_p, ncd_p), lambda i: (0, 0)),   # fused Wc|Wd (resident)
        pl.BlockSpec((1, ncd_p), lambda i: (0, 0)),       # fused bc|bd
    ]
    out_specs = pl.BlockSpec((tile_b, ncd_p), lambda i: (i, 0))  # lane-dense output slab

    out = pl.pallas_call(
        classify_ae_kernel,
        out_shape=jax.ShapeDtypeStruct((B, ncd_p), x.dtype),
        grid=grid,
        in_specs=in_specs,
        out_specs=out_specs,
        compiler_params=pltpu.CompilerParams(
            dimension_semantics=("parallel",),
            vmem_limit_bytes=vmem_bytes,
        ),
        cost_estimate=cost,
    )(x_c, we, be, wcd, bcd)

    # split fused slab back into (y_hat, x_) and drop the 128-lane pad
    y_hat = out[:, :out_f]
    x_rec = out[:, out_f:ncd]
    return y_hat, x_rec


def init_params(key, in_features, hid_features, out_features):
    """PyTorch-Linear-style init: uniform(-1/sqrt(fan_in), 1/sqrt(fan_in)), stored (in, out)."""
    ks = jax.random.split(key, 6)

    def lin(kw, kb, fan_in, fan_out):
        bound = 1.0 / jnp.sqrt(fan_in)
        w = jax.random.uniform(kw, (fan_in, fan_out), jnp.float32, -bound, bound)
        b = jax.random.uniform(kb, (1, fan_out), jnp.float32, -bound, bound)
        return w, b

    we, be = lin(ks[0], ks[1], in_features, hid_features)   # encoder
    wc, bc = lin(ks[2], ks[3], hid_features, out_features)  # clf
    wd, bd = lin(ks[4], ks[5], hid_features, in_features)   # decoder
    return {"we": we, "be": be, "wc": wc, "bc": bc, "wd": wd, "bd": bd}


def reference_forward(x, p):
    z = jnp.tanh(x @ p["we"] + p["be"])
    return z @ p["wc"] + p["bc"], z @ p["wd"] + p["bd"]


if __name__ == "__main__":
    # Small shapes consistent with ClassifyAE(in_features, hid_features, out_features)
    batch, in_features, hid_features, out_features = 64, 64, 32, 16

    key = jax.random.PRNGKey(0)
    kx, kp = jax.random.split(key)
    x = jax.random.normal(kx, (batch, in_features), dtype=jnp.float32)
    params = init_params(kp, in_features, hid_features, out_features)

    fwd = jax.jit(functools.partial(classify_ae_forward))  # auto tile_b -> 32 (2 grid steps)
    y_hat, x_rec = fwd(x, params)
    y_hat, x_rec = jax.block_until_ready((y_hat, x_rec))

    # Correctness check vs pure-f32 JAX reference (loose tol: bf16 MXU operands)
    y_ref, x_ref = reference_forward(x, params)
    assert y_hat.shape == (batch, out_features)
    assert x_rec.shape == (batch, in_features)
    assert jnp.allclose(y_hat, y_ref, atol=5e-2, rtol=5e-2)
    assert jnp.allclose(x_rec, x_ref, atol=5e-2, rtol=5e-2)

    print("KERNEL_OK")
</pallas_src>

<mosaic_0001>
module attributes {stable_mosaic.version = 11 : i64} {
  func.func @classify_ae_kernel(%arg0: i32, %arg1: memref<32x64xbf16, #tpu.memory_space<vmem>>, %arg2: memref<64x128xbf16, #tpu.memory_space<vmem>>, %arg3: memref<1x128xf32, #tpu.memory_space<vmem>>, %arg4: memref<128x128xbf16, #tpu.memory_space<vmem>>, %arg5: memref<1x128xf32, #tpu.memory_space<vmem>>, %arg6: memref<32x128xf32, #tpu.memory_space<vmem>>) attributes {dimension_semantics = [#tpu.dimension_semantics<parallel>], iteration_bounds = array<i64: 2>, scalar_prefetch = 0 : i64, scratch_operands = 0 : i64, tpu.core_type = #tpu.core_type<tc>, window_params = [{transform_indices = @transform_0, window_bounds = array<i64: 32, 64>}, {pipeline_mode = #tpu.pipeline_mode<synchronous>, transform_indices = @transform_1, window_bounds = array<i64: 64, 128>}, {pipeline_mode = #tpu.pipeline_mode<synchronous>, transform_indices = @transform_2, window_bounds = array<i64: 1, 128>}, {pipeline_mode = #tpu.pipeline_mode<synchronous>, transform_indices = @transform_3, window_bounds = array<i64: 128, 128>}, {pipeline_mode = #tpu.pipeline_mode<synchronous>, transform_indices = @transform_4, window_bounds = array<i64: 1, 128>}, {transform_indices = @transform_5, window_bounds = array<i64: 32, 128>}]} {
    %c0 = arith.constant 0 : index
    %c0_0 = arith.constant 0 : index
    %0 = vector.load %arg1[%c0, %c0_0] : memref<32x64xbf16, #tpu.memory_space<vmem>>, vector<32x64xbf16>
    %c0_1 = arith.constant 0 : index
    %c0_2 = arith.constant 0 : index
    %1 = vector.load %arg2[%c0_1, %c0_2] : memref<64x128xbf16, #tpu.memory_space<vmem>>, vector<64x128xbf16>
    %cst = arith.constant dense<0.000000e+00> : vector<32x128xf32>
    %2 = tpu.matmul %0, %1, %cst {dimension_numbers = #tpu.dot_dimension_numbers<[1], [0], [0], [1], [0, 0, 1, 1], [], []>} : vector<32x64xbf16>, vector<64x128xbf16>, vector<32x128xf32> -> vector<32x128xf32>
    %c0_3 = arith.constant 0 : index
    %c0_4 = arith.constant 0 : index
    %3 = vector.load %arg3[%c0_3, %c0_4] : memref<1x128xf32, #tpu.memory_space<vmem>>, vector<1x128xf32>
    %4 = vector.broadcast %3 : vector<1x128xf32> to vector<32x128xf32>
    %5 = arith.addf %2, %4 : vector<32x128xf32>
    %6 = math.tanh %5 : vector<32x128xf32>
    %7 = arith.truncf %6 : vector<32x128xf32> to vector<32x128xbf16>
    %c0_5 = arith.constant 0 : index
    %c0_6 = arith.constant 0 : index
    %8 = vector.load %arg4[%c0_5, %c0_6] : memref<128x128xbf16, #tpu.memory_space<vmem>>, vector<128x128xbf16>
    %cst_7 = arith.constant dense<0.000000e+00> : vector<32x128xf32>
    %9 = tpu.matmul %7, %8, %cst_7 {dimension_numbers = #tpu.dot_dimension_numbers<[1], [0], [0], [1], [0, 0, 1, 1], [], []>} : vector<32x128xbf16>, vector<128x128xbf16>, vector<32x128xf32> -> vector<32x128xf32>
    %c0_8 = arith.constant 0 : index
    %c0_9 = arith.constant 0 : index
    %10 = vector.load %arg5[%c0_8, %c0_9] : memref<1x128xf32, #tpu.memory_space<vmem>>, vector<1x128xf32>
    %11 = vector.broadcast %10 : vector<1x128xf32> to vector<32x128xf32>
    %12 = arith.addf %9, %11 : vector<32x128xf32>
    %c0_10 = arith.constant 0 : index
    %c0_11 = arith.constant 0 : index
    %13 = vector.load %arg6[%c0_10, %c0_11] : memref<32x128xf32, #tpu.memory_space<vmem>>, vector<32x128xf32>
    tpu.vector_store %arg6[%c0_10, %c0_11], %12 {strides = array<i32>} : memref<32x128xf32, #tpu.memory_space<vmem>>, vector<32x128xf32>,
    return
  }
  func.func @transform_0(%arg0: i32) -> (i32, i32) {
    %c0_i32 = arith.constant 0 : i32
    %c0_i32_0 = arith.constant 0 : i32
    return %arg0, %c0_i32 : i32, i32
  }
  func.func @transform_1(%arg0: i32) -> (i32, i32) {
    %c0_i32 = arith.constant 0 : i32
    %c0_i32_0 = arith.constant 0 : i32
    %c0_i32_1 = arith.constant 0 : i32
    return %c0_i32, %c0_i32_0 : i32, i32
  }
  func.func @transform_2(%arg0: i32) -> (i32, i32) {
    %c0_i32 = arith.constant 0 : i32
    %c0_i32_0 = arith.constant 0 : i32
    %c0_i32_1 = arith.constant 0 : i32
    return %c0_i32, %c0_i32_0 : i32, i32
  }
  func.func @transform_3(%arg0: i32) -> (i32, i32) {
    %c0_i32 = arith.constant 0 : i32
    %c0_i32_0 = arith.constant 0 : i32
    %c0_i32_1 = arith.constant 0 : i32
    return %c0_i32, %c0_i32_0 : i32, i32
  }
  func.func @transform_4(%arg0: i32) -> (i32, i32) {
    %c0_i32 = arith.constant 0 : i32
    %c0_i32_0 = arith.constant 0 : i32
    %c0_i32_1 = arith.constant 0 : i32
    return %c0_i32, %c0_i32_0 : i32, i32
  }
  func.func @transform_5(%arg0: i32) -> (i32, i32) {
    %c0_i32 = arith.constant 0 : i32
    %c0_i32_0 = arith.constant 0 : i32
    return %arg0, %c0_i32 : i32, i32
  }
}

</mosaic_0001>

<llo_original>
// kernel: classify_ae_forward.1
$region0: #{classify_ae_forward.1}
  #allocation0 [shape = 'u32[]', space=smem, size = 0x4, offset = 0x4, fixed_abs, tag = 'smem constant byte address 0x4 - core index']
  #allocation1 [shape = 'u32[72,128]{1,0:T(1,128)}', space=vmem, size = 0x9000, scoped, tag = 'internal scratch']
  %s0 = inlined_call_operand.vmem [shape: bf16[64,64], index: 0, kind: input, shape index: {}]
  %s1 = inlined_call_operand.vmem [shape: bf16[64,128], index: 1, kind: input, shape index: {}]
  %s2 = inlined_call_operand.vmem [shape: f32[1,128], index: 2, kind: input, shape index: {}]
  %s3 = inlined_call_operand.vmem [shape: bf16[128,128], index: 3, kind: input, shape index: {}]
  %s4 = inlined_call_operand.vmem [shape: f32[1,128], index: 4, kind: input, shape index: {}]
  %s5 = inlined_call_operand.vmem [shape: f32[64,128], index: 5, kind: output, shape index: {}]
  %s6 = sld [smem:[#allocation0]]
  $region53: #{classify_ae_forward.1} parent=0
    _
  %s8 = ssub.s32 1, %s6
  %s9 = scalar_select 0, %s8, %s6
  loop: start=0, step=1, limit=4
  $region2: #{classify_ae_forward.1} parent=0 // loop_pre_header
    _
  $region3: #{classify_ae_forward.1} parent=0 // loop_header
    %s11 = sphi 0, %s15
    %p12 = scmp.ge.s32.totalorder %s11, 4
    %s21 = sphi 0, %s23
    %s24 = sphi 0, %s21
    %s25 = sphi 0, %s24
    %s41 = sphi 0, %s25
    %s45 = sphi 0, %s45
    %s47 = sphi 0, %s45
    %s48 = sphi 0, %s47
    %s62 = sphi 0, %s48
    %s66 = sphi 0, %s66
    %s68 = sphi 0, %s66
    %s69 = sphi 0, %s68
    %s83 = sphi 0, %s69
    %s87 = sphi 0, %s87
    %s89 = sphi 0, %s87
    %s90 = sphi 0, %s89
    %s104 = sphi 0, %s90
    %s108 = sphi 0, %s108
    %s110 = sphi 0, %s108
    %s111 = sphi 0, %s110
    %s125 = sphi 0, %s111
    %s131 = sphi 0, %s133
    %s134 = sphi 0, %s131
    %s135 = sphi 0, %s134
    %s151 = sphi 0, %s135
  $region4: #{classify_ae_forward.1} parent=0 // loop_header_branch
    %14 = sbr.rel (%p12) target = $region8
  $region5: #{classify_ae_forward.1} parent=0 // loop_body
    %s16 = ssub.s32 %s11, 1
    %s17 = ssub.s32 %s11, 2
    %s18 = sadd.s32 %s11, 1
    %s19 = ssub.s32 %s11, %s18
    %p20 = scmp.eq.s32.totalorder %s19, 0
    %s22 = sadd.s32 %s21, 1
    %s23 = scalar_select %p20, %s21, %s22
    %p26 = pneg %p20
    %p27 = scmp.eq.s32.totalorder %s11, 1
    %p28 = por %p26, %p27
    %p29 = scmp.ne.s32.totalorder %s21, %s24
    %p30 = scmp.eq.s32.totalorder %s11, 0
    %p31 = por %p29, %p30
    %p32 = scmp.ne.s32.totalorder %s21, %s24
    %p33 = scmp.eq.s32.totalorder %s16, 1
    %p34 = por %p32, %p33
    %p35 = scmp.ne.s32.totalorder %s24, %s25
    %p36 = scmp.eq.s32.totalorder %s16, 0
    %p37 = por %p35, %p36
    %p38 = scmp.ne.s32.totalorder %s24, %s25
    %p39 = scmp.eq.s32.totalorder %s17, 1
    %p40 = por %p38, %p39
    %p42 = scmp.ne.s32.totalorder %s25, %s41
    %p43 = scmp.eq.s32.totalorder %s17, 0
    %p44 = por %p42, %p43
    %s46 = sadd.s32 %s45, 1
    %p49 = scmp.eq.s32.totalorder %s11, 1
    %p50 = scmp.ne.s32.totalorder %s45, %s47
    %p51 = scmp.eq.s32.totalorder %s11, 0
    %p52 = por %p50, %p51
    %p53 = scmp.ne.s32.totalorder %s45, %s47
    %p54 = scmp.eq.s32.totalorder %s16, 1
    %p55 = por %p53, %p54
    %p56 = scmp.ne.s32.totalorder %s47, %s48
    %p57 = scmp.eq.s32.totalorder %s16, 0
    %p58 = por %p56, %p57
    %p59 = scmp.ne.s32.totalorder %s47, %s48
    %p60 = scmp.eq.s32.totalorder %s17, 1
    %p61 = por %p59, %p60
    %p63 = scmp.ne.s32.totalorder %s48, %s62
    %p64 = scmp.eq.s32.totalorder %s17, 0
    %p65 = por %p63, %p64
    %s67 = sadd.s32 %s66, 1
    %p70 = scmp.eq.s32.totalorder %s11, 1
    %p71 = scmp.ne.s32.totalorder %s66, %s68
    %p72 = scmp.eq.s32.totalorder %s11, 0
    %p73 = por %p71, %p72
    %p74 = scmp.ne.s32.totalorder %s66, %s68
    %p75 = scmp.eq.s32.totalorder %s16, 1
    %p76 = por %p74, %p75
    %p77 = scmp.ne.s32.totalorder %s68, %s69
    %p78 = scmp.eq.s32.totalorder %s16, 0
    %p79 = por %p77, %p78
    %p80 = scmp.ne.s32.totalorder %s68, %s69
    %p81 = scmp.eq.s32.totalorder %s17, 1
    %p82 = por %p80, %p81
    %p84 = scmp.ne.s32.totalorder %s69, %s83
    %p85 = scmp.eq.s32.totalorder %s17, 0
    %p86 = por %p84, %p85
    %s88 = sadd.s32 %s87, 1
    %p91 = scmp.eq.s32.totalorder %s11, 1
    %p92 = scmp.ne.s32.totalorder %s87, %s89
    %p93 = scmp.eq.s32.totalorder %s11, 0
    %p94 = por %p92, %p93
    %p95 = scmp.ne.s32.totalorder %s87, %s89
    %p96 = scmp.eq.s32.totalorder %s16, 1
    %p97 = por %p95, %p96
    %p98 = scmp.ne.s32.totalorder %s89, %s90
    %p99 = scmp.eq.s32.totalorder %s16, 0
    %p100 = por %p98, %p99
    %p101 = scmp.ne.s32.totalorder %s89, %s90
    %p102 = scmp.eq.s32.totalorder %s17, 1
    %p103 = por %p101, %p102
    %p105 = scmp.ne.s32.totalorder %s90, %s104
    %p106 = scmp.eq.s32.totalorder %s17, 0
    %p107 = por %p105, %p106
    %s109 = sadd.s32 %s108, 1
    %p112 = scmp.eq.s32.totalorder %s11, 1
    %p113 = scmp.ne.s32.totalorder %s108, %s110
    %p114 = scmp.eq.s32.totalorder %s11, 0
    %p115 = por %p113, %p114
    %p116 = scmp.ne.s32.totalorder %s108, %s110
    %p117 = scmp.eq.s32.totalorder %s16, 1
    %p118 = por %p116, %p117
    %p119 = scmp.ne.s32.totalorder %s110, %s111
    %p120 = scmp.eq.s32.totalorder %s16, 0
    %p121 = por %p119, %p120
    %p122 = scmp.ne.s32.totalorder %s110, %s111
    %p123 = scmp.eq.s32.totalorder %s17, 1
    %p124 = por %p122, %p123
    %p126 = scmp.ne.s32.totalorder %s111, %s125
    %p127 = scmp.eq.s32.totalorder %s17, 0
    %p128 = por %p126, %p127
    %s129 = ssub.s32 %s11, %s18
    %p130 = scmp.eq.s32.totalorder %s129, 0
    %s132 = sadd.s32 %s131, 1
    %s133 = scalar_select %p130, %s131, %s132
    %p136 = pneg %p130
    %p137 = scmp.eq.s32.totalorder %s11, 1
    %p138 = por %p136, %p137
    %p139 = scmp.ne.s32.totalorder %s131, %s134
    %p140 = scmp.eq.s32.totalorder %s11, 0
    %p141 = por %p139, %p140
    %p142 = scmp.ne.s32.totalorder %s131, %s134
    %p143 = scmp.eq.s32.totalorder %s16, 1
    %p144 = por %p142, %p143
    %p145 = scmp.ne.s32.totalorder %s134, %s135
    %p146 = scmp.eq.s32.totalorder %s16, 0
    %p147 = por %p145, %p146
    %p148 = scmp.ne.s32.totalorder %s134, %s135
    %p149 = scmp.eq.s32.totalorder %s17, 1
    %p150 = por %p148, %p149
    %p152 = scmp.ne.s32.totalorder %s135, %s151
    %p153 = scmp.eq.s32.totalorder %s17, 0
    %p154 = por %p152, %p153
    %p155 = scmp.le.s32.totalorder 1, %s11
    %p156 = scmp.lt.s32.totalorder %s11, 3
    %p157 = pnand %p155, %p156
    %p158 = pneg %p157
    // Predicated region
    $region9: #{classify_ae_forward.1} parent=5 // pred_check
      _
    $region10: #{classify_ae_forward.1} parent=5 // pred_check_branch
      %160 = sbr.rel (%p157) target = $region12
    $region11: #{classify_ae_forward.1} parent=5 // pred_region
      %s161 = ssub.s32 %s11, 1
      // Predicated region
      $region13: #{classify_ae_forward.1} parent=11 // pred_check
        %p162 = pneg %p58
      $region14: #{classify_ae_forward.1} parent=11 // pred_check_branch
        %164 = sbr.rel (%p162) target = $region16
      $region15: #{classify_ae_forward.1} parent=11 // pred_region
        _
      $region16: #{classify_ae_forward.1} parent=11 // pred_fallthru
        _
      // Predicated region
      $region17: #{classify_ae_forward.1} parent=11 // pred_check
        %p165 = pneg %p79
      $region18: #{classify_ae_forward.1} parent=11 // pred_check_branch
        %167 = sbr.rel (%p165) target = $region20
      $region19: #{classify_ae_forward.1} parent=11 // pred_region
        _
      $region20: #{classify_ae_forward.1} parent=11 // pred_fallthru
        _
      // Predicated region
      $region21: #{classify_ae_forward.1} parent=11 // pred_check
        %p168 = pneg %p100
      $region22: #{classify_ae_forward.1} parent=11 // pred_check_branch
        %170 = sbr.rel (%p168) target = $region24
      $region23: #{classify_ae_forward.1} parent=11 // pred_region
        _
      $region24: #{classify_ae_forward.1} parent=11 // pred_fallthru
        _
      // Predicated region
      $region25: #{classify_ae_forward.1} parent=11 // pred_check
        %p171 = pneg %p121
      $region26: #{classify_ae_forward.1} parent=11 // pred_check_branch
        %173 = sbr.rel (%p171) target = $region28
      $region27: #{classify_ae_forward.1} parent=11 // pred_region
        _
      $region28: #{classify_ae_forward.1} parent=11 // pred_fallthru
        _
    $region12: #{classify_ae_forward.1} parent=5 // pred_fallthru
      _
    %p174 = scmp.lt.s32.totalorder %s11, 2
    // Predicated region
    $region29: #{classify_ae_forward.1} parent=5 // pred_check
      %p175 = pneg %p174
    $region30: #{classify_ae_forward.1} parent=5 // pred_check_branch
      %177 = sbr.rel (%p175) target = $region32
    $region31: #{classify_ae_forward.1} parent=5 // pred_region
      // Predicated region
      $region33: #{classify_ae_forward.1} parent=31 // pred_check
        %p178 = pneg %p31
      $region34: #{classify_ae_forward.1} parent=31 // pred_check_branch
        %180 = sbr.rel (%p178) target = $region36
      $region35: #{classify_ae_forward.1} parent=31 // pred_region
        %s181 = smul.u32 4, %s11
        %p182 = scmp.lt.s32.totalorder %s181, 7
        %s183 = scalar_select %p182, %s181, 7
        %s184 = smul.addr %s183, 4
        %s185 = scalar_lea.vmem %s0, %s184
        %s186 = smul.u32 4, %s11
      $region36: #{classify_ae_forward.1} parent=31 // pred_fallthru
        _
    $region32: #{classify_ae_forward.1} parent=5 // pred_fallthru
      _
    %p187 = scmp.le.s32.totalorder 1, %s11
    %p188 = scmp.lt.s32.totalorder %s11, 3
    %p189 = pnand %p187, %p188
    %p190 = pneg %p189
    // Predicated region
    $region37: #{classify_ae_forward.1} parent=5 // pred_check
      _
    $region38: #{classify_ae_forward.1} parent=5 // pred_check_branch
      %192 = sbr.rel (%p189) target = $region40
    $region39: #{classify_ae_forward.1} parent=5 // pred_region
      %s193 = ssub.s32 %s11, 1
      %s194 = smul.u32 4, %s16
      %p195 = scmp.lt.s32.totalorder %s194, 7
      %s196 = scalar_select %p195, %s194, 7
      %s197 = smul.addr %s196, 4
      %s198 = scalar_lea.vmem %s0, %s197
      %p199 = pneg %p37
      %p200 = pneg %p34
      %p201 = pneg %p58
      %p202 = pneg %p55
      %p203 = pneg %p79
      %p204 = pneg %p76
      %p205 = pneg %p100
      %p206 = pneg %p97
      %p207 = pneg %p121
      %p208 = pneg %p118
      %p209 = pneg %p147
      %p210 = pneg %p144
      %s211 = smul.u32 4, %s16
      %p212 = scmp.lt.s32.totalorder %s211, 7
      %s213 = scalar_select %p212, %s211, 7
      %s214 = smul.addr %s213, 8
      %s215 = scalar_lea.vmem %s5, %s214
      %s216 = smul.u32 4, %s16
      %p217 = scmp.lt.s32.totalorder %s216, 7
      %s218 = scalar_select %p217, %s216, 7
      %s219 = smul.addr %s218, 4
      %s220 = scalar_lea.vmem %s0, %s219
      %s221 = smul.u32 4, %s16
      %s222 = smul.u32 4, %s16
      %p223 = scmp.lt.s32.totalorder %s222, 7
      %s224 = scalar_select %p223, %s222, 7
      %s225 = smul.addr %s224, 8
      %s226 = scalar_lea.vmem %s5, %s225
      %s227 = smul.u32 4, %s16
      %v229 = vld [vmem:[%s220] sm:$0xf]
      %v230 = vld [vmem:[%s220 + $0x4] sm:$0xf]
      %v231 = vld [vmem:[%s220 + $0x8] sm:$0xf]
      %v232 = vld [vmem:[%s220 + $0xc] sm:$0xf]
      %v233 = vld [vmem:[%s1] sm:$0xf]
      %v234 = vld [vmem:[%s1 + $0x4] sm:$0xf]
      %v235 = vld [vmem:[%s1 + $0x8] sm:$0xf]
      %v236 = vld [vmem:[%s1 + $0xc] sm:$0xf]
      %v237 = vld [vmem:[%s1 + $0x10] sm:$0xf]
      %v238 = vld [vmem:[%s1 + $0x14] sm:$0xf]
      %v239 = vld [vmem:[%s1 + $0x18] sm:$0xf]
      %v240 = vld [vmem:[%s1 + $0x1c] sm:$0xf]
      %v241 = vld [vmem:[%s2] sm:$0x1]
      %v243 = vperm.slane %v241, 0
      %v249 = vunpack.c.l.b16 %v229
      %v250 = vunpack.c.l.b16 %v230
      %v251 = vunpack.c.l.b16 %v231
      %v252 = vunpack.c.l.b16 %v232
      %v253 = vpack.c.b16 %v250, %v249
      %v254 = vpack.c.b16 %v252, %v251
      %v263 = vunpack.c.l.b16 %v233
      %v264 = vunpack.c.l.b16 %v234
      %v265 = vunpack.c.l.b16 %v235
      %v266 = vunpack.c.l.b16 %v236
      %v267 = vunpack.c.l.b16 %v237
      %v268 = vunpack.c.l.b16 %v238
      %v269 = vunpack.c.l.b16 %v239
      %v270 = vunpack.c.l.b16 %v240
      %v271 = vpack.c.b16 %v264, %v263
      %v272 = vpack.c.b16 %v266, %v265
      %v273 = vpack.c.b16 %v268, %v267
      %v274 = vpack.c.b16 %v270, %v269
      %vm279 = vcmask 523264
      %v281 = vsel %vm279, %v253, 0
      %v284 = vsel %vm279, %v254, 0
      %286 = vmatpush.bf16.msra.mxu0 0
      %287 = vmatpush.bf16.msra.mxu0 0
      %288 = vmatpush.bf16.msra.mxu0 0
      %289 = vmatpush.bf16.msra.mxu0 0
      %290 = vmatpush.bf16.msra.mxu0 %v274
      %291 = vmatpush.bf16.msra.mxu0 %v273
      %292 = vmatpush.bf16.msra.mxu0 %v272
      %293 = vmatpush.bf16.msra.mxu0 %v271
      %294 = vmatmul.bf16.gmra.mxu0 %v281
      %v295 = vpop.f32.mrf.mxu0
      %v296 = vadd.f32 %v243, %v295
      %v297 = vpop.f32.mrf.mxu0
      %v298 = vadd.f32 %v243, %v297
      %299 = vmatmul.bf16.gmra.mxu0 %v284
      %v300 = vpop.f32.mrf.mxu0
      %v301 = vadd.f32 %v243, %v300
      %v302 = vpop.f32.mrf.mxu0
      %v303 = vadd.f32 %v243, %v302
      %304 = vdwg.mxu0
      %v305 = vtanh.pop %v296
      %v306 = vtanh.pop %v298
      %v307 = vtanh.pop %v301
      %v308 = vtanh.pop %v303
      %v309 = vpack.c.bf16 %v306, %v305
      %v310 = vpack.c.bf16 %v308, %v307
      %v311 = vld [vmem:[%s3] sm:$0xf]
      %v312 = vld [vmem:[%s3 + $0x4] sm:$0xf]
      %v313 = vld [vmem:[%s3 + $0x8] sm:$0xf]
      %v314 = vld [vmem:[%s3 + $0xc] sm:$0xf]
      %v315 = vld [vmem:[%s3 + $0x10] sm:$0xf]
      %v316 = vld [vmem:[%s3 + $0x14] sm:$0xf]
      %v317 = vld [vmem:[%s3 + $0x18] sm:$0xf]
      %v318 = vld [vmem:[%s3 + $0x1c] sm:$0xf]
      %v319 = vld [vmem:[%s3 + $0x20] sm:$0xf]
      %v320 = vld [vmem:[%s3 + $0x24] sm:$0xf]
      %v321 = vld [vmem:[%s3 + $0x28] sm:$0xf]
      %v322 = vld [vmem:[%s3 + $0x2c] sm:$0xf]
      %v323 = vld [vmem:[%s3 + $0x30] sm:$0xf]
      %v324 = vld [vmem:[%s3 + $0x34] sm:$0xf]
      %v325 = vld [vmem:[%s3 + $0x38] sm:$0xf]
      %v326 = vld [vmem:[%s3 + $0x3c] sm:$0xf]
      %v327 = vld [vmem:[%s4] sm:$0x1]
      %v329 = vperm.slane %v327, 0
      %v347 = vunpack.c.l.b16 %v311
      %v348 = vunpack.c.l.b16 %v312
      %v349 = vunpack.c.l.b16 %v313
      %v350 = vunpack.c.l.b16 %v314
      %v351 = vunpack.c.l.b16 %v315
      %v352 = vunpack.c.l.b16 %v316
      %v353 = vunpack.c.l.b16 %v317
      %v354 = vunpack.c.l.b16 %v318
      %v355 = vunpack.c.l.b16 %v319
      %v356 = vunpack.c.l.b16 %v320
      %v357 = vunpack.c.l.b16 %v321
      %v358 = vunpack.c.l.b16 %v322
      %v359 = vunpack.c.l.b16 %v323
      %v360 = vunpack.c.l.b16 %v324
      %v361 = vunpack.c.l.b16 %v325
      %v362 = vunpack.c.l.b16 %v326
      %v363 = vpack.c.b16 %v348, %v347
      %v364 = vpack.c.b16 %v350, %v349
      %v365 = vpack.c.b16 %v352, %v351
      %v366 = vpack.c.b16 %v354, %v353
      %v367 = vpack.c.b16 %v356, %v355
      %v368 = vpack.c.b16 %v358, %v357
      %v369 = vpack.c.b16 %v360, %v359
      %v370 = vpack.c.b16 %v362, %v361
      %379 = vmatpush.bf16.msra.mxu0 %v370
      %380 = vmatpush.bf16.msra.mxu0 %v369
      %381 = vmatpush.bf16.msra.mxu0 %v368
      %382 = vmatpush.bf16.msra.mxu0 %v367
      %383 = vmatpush.bf16.msra.mxu0 %v366
      %384 = vmatpush.bf16.msra.mxu0 %v365
      %385 = vmatpush.bf16.msra.mxu0 %v364
      %386 = vmatpush.bf16.msra.mxu0 %v363
      %387 = vmatmul.bf16.gmra.mxu0 %v309
      %v388 = vpop.f32.mrf.mxu0
      %v389 = vadd.f32 %v329, %v388
      %v390 = vpop.f32.mrf.mxu0
      %v391 = vadd.f32 %v329, %v390
      %392 = vmatmul.bf16.gmra.mxu0 %v310
      %v393 = vpop.f32.mrf.mxu0
      %v394 = vadd.f32 %v329, %v393
      %v395 = vpop.f32.mrf.mxu0
      %v396 = vadd.f32 %v329, %v395
      %397 = vdwg.mxu0
      %398 = vst [vmem:[%s226] sm:$0xff] %v389
      %399 = vst [vmem:[%s226 + $0x8] sm:$0xff] %v391
      %400 = vst [vmem:[%s226 + $0x10] sm:$0xff] %v394
      %401 = vst [vmem:[%s226 + $0x18] sm:$0xff] %v396
      %s402 = smul.u32 4, %s16
      %p403 = scmp.lt.s32.totalorder %s402, 7
      %s404 = scalar_select %p403, %s402, 7
      %s405 = smul.addr %s404, 8
      %s406 = scalar_lea.vmem %s5, %s405
      // Predicated region
      $region41: #{classify_ae_forward.1} parent=39 // pred_check
        %p407 = pneg %p144
      $region42: #{classify_ae_forward.1} parent=39 // pred_check_branch
        %409 = sbr.rel (%p407) target = $region44
      $region43: #{classify_ae_forward.1} parent=39 // pred_region
        %s410 = smul.u32 4, %s16
      $region44: #{classify_ae_forward.1} parent=39 // pred_fallthru
        _
    $region40: #{classify_ae_forward.1} parent=5 // pred_fallthru
      _
    %p411 = scmp.le.s32.totalorder 2, %s11
    // Predicated region
    $region45: #{classify_ae_forward.1} parent=5 // pred_check
      %p412 = pneg %p411
    $region46: #{classify_ae_forward.1} parent=5 // pred_check_branch
      %414 = sbr.rel (%p412) target = $region48
    $region47: #{classify_ae_forward.1} parent=5 // pred_region
      %s415 = ssub.s32 %s11, 2
      // Predicated region
      $region49: #{classify_ae_forward.1} parent=47 // pred_check
        %p416 = pneg %p150
      $region50: #{classify_ae_forward.1} parent=47 // pred_check_branch
        %418 = sbr.rel (%p416) target = $region52
      $region51: #{classify_ae_forward.1} parent=47 // pred_region
        %s419 = smul.u32 4, %s17
        %p420 = scmp.lt.s32.totalorder %s419, 7
        %s421 = scalar_select %p420, %s419, 7
        %s422 = smul.addr %s421, 8
        %s423 = scalar_lea.vmem %s5, %s422
      $region52: #{classify_ae_forward.1} parent=47 // pred_fallthru
        _
    $region48: #{classify_ae_forward.1} parent=5 // pred_fallthru
      _
  $region6: #{classify_ae_forward.1} parent=0 // loop_footer
    %s15 = sadd.s32 1, %s11
  $region7: #{classify_ae_forward.1} parent=0 // loop_footer_branch
    %10 = sbr.rel target = $region3
  $region8: #{classify_ae_forward.1} parent=0 // loop_exit
    _

</llo_original>
